<compile_context>
chip_gen: v7x
topology: tpu7x:2x2x1
jax: 0.10.0
libtpu: 0.0.40
codegen_flags: <defaults>
</compile_context>

<pallas_src>
import functools

import jax
import jax.numpy as jnp
from jax.experimental import pallas as pl
from jax.experimental.pallas import tpu as pltpu


def _round_up(x, m):
    return ((x + m - 1) // m) * m


def _make_resident_kernel(num_branches, fuse_branches, compute_dtype):
    """Whole weight resident in VMEM; grid = (M tiles,)."""

    def kernel(*refs):
        orig_ref = refs[0]
        x_refs = refs[1:1 + num_branches]
        w_ref, b_ref, o_ref = refs[1 + num_branches:]

        if fuse_branches:
            # Narrow branches: build one contiguous (tm, K) operand in vregs and
            # issue a single MXU dot (avoids short-K fill/drain per branch).
            merged = jnp.concatenate(
                [x_refs[j][...].astype(compute_dtype) for j in range(num_branches)],
                axis=-1)
            acc = jnp.dot(merged, w_ref[...], preferred_element_type=jnp.float32)
        else:
            # cat-then-matmul == sum of per-branch slab matmuls; w_ref[j] is a
            # zero-cost view of the (n_embd, N) slab (weight is (nb, D, N)).
            acc = jnp.dot(x_refs[0][...].astype(compute_dtype), w_ref[0],
                          preferred_element_type=jnp.float32)
            for j in range(1, num_branches):
                acc = acc + jnp.dot(x_refs[j][...].astype(compute_dtype), w_ref[j],
                                    preferred_element_type=jnp.float32)

        out = (orig_ref[...].astype(jnp.float32) + acc
               + b_ref[...].astype(jnp.float32)) * 0.5
        o_ref[...] = out.astype(o_ref.dtype)

    return kernel


def _make_split_kernel(num_branches, compute_dtype):
    """Branch-split accumulator path; grid = (M tiles, num_branches)."""

    def kernel(*refs):
        orig_ref = refs[0]
        x_refs = refs[1:1 + num_branches]
        w_ref, b_ref, o_ref, acc_ref = refs[1 + num_branches:]
        bi = pl.program_id(1)

        @pl.when(bi == 0)
        def _():
            acc_ref[...] = jnp.zeros_like(acc_ref)

        # Exactly one branch dot runs per grid step; pal tiles are constant over
        # the branch axis (no re-DMA), only the (n_embd, N) weight slab changes.
        for j in range(num_branches):
            @pl.when(bi == j)
            def _(j=j):
                acc_ref[...] += jnp.dot(
                    x_refs[j][...].astype(compute_dtype), w_ref[...],
                    preferred_element_type=jnp.float32)

        @pl.when(bi == num_branches - 1)
        def _():
            out = (orig_ref[...].astype(jnp.float32) + acc_ref[...]
                   + b_ref[...].astype(jnp.float32)) * 0.5
            o_ref[...] = out.astype(o_ref.dtype)

    return kernel


def _const_spec(block_shape, index_map, single_buffer):
    # Constant-index inputs (weight / bias) don't need double buffering.
    if single_buffer:
        return pl.BlockSpec(block_shape, index_map, pipeline_mode=pl.Buffered(1))
    return pl.BlockSpec(block_shape, index_map)


@functools.partial(
    jax.jit, static_argnames=("tm", "force_split", "single_buffer_weight"))
def _blend_impl(original, pals, w_t, bias, *, tm, force_split, single_buffer_weight):
    num_branches = len(pals)
    n_embd = original.shape[-1]
    K, N = w_t.shape
    assert num_branches >= 1
    assert K == n_embd * num_branches and N == n_embd

    lead = original.shape[:-1]
    M = 1
    for d in lead:
        M *= d

    out_dtype = original.dtype
    compute_dtype = w_t.dtype          # MXU dtype follows the weight dtype

    orig2d = original.reshape(M, n_embd)
    pal2ds = [p.reshape(M, n_embd) for p in pals]
    b2d = bias.reshape(1, N)

    # Tile the flattened token axis; rely on masked partial edge blocks
    # (no wrapper-side jnp.pad / output slice => no extra HBM round-trip).
    tm_eff = M if M <= tm else _round_up(tm, 8)
    grid_m = pl.cdiv(M, tm_eff)

    # --- generation-aware VMEM budgeting ---
    try:
        vmem_cap = int(pltpu.get_tpu_info().vmem_capacity_bytes)
    except Exception:  # conservative fallback if the query is unavailable
        vmem_cap = 64 * 2**20
    vmem_budget = int(vmem_cap * 0.78)  # headroom for compiler scratch/semaphores

    def _isz(dt):
        return jnp.dtype(dt).itemsize

    w_bufs = 1 if single_buffer_weight else 2
    act_tiles = 2 * tm_eff * n_embd * (_isz(original.dtype)
                                       + sum(_isz(p.dtype) for p in pals))
    out_tiles = 2 * tm_eff * N * _isz(out_dtype)
    bias_bytes = N * _isz(bias.dtype)
    resident_est = (w_bufs * K * N * _isz(compute_dtype)
                    + act_tiles + out_tiles + bias_bytes)
    split_est = (2 * n_embd * N * _isz(compute_dtype)
                 + act_tiles + out_tiles + bias_bytes + tm_eff * N * 4)

    use_split = force_split or (resident_est > vmem_budget // 2)
    est_vmem = split_est if use_split else resident_est
    vmem_limit = int(min(max(2 * est_vmem, 32 * 2**20), vmem_budget))

    cost = pl.CostEstimate(
        flops=2 * M * K * N + 3 * M * N,
        transcendentals=0,
        bytes_accessed=(M * n_embd * _isz(original.dtype)
                        + sum(M * n_embd * _isz(p.dtype) for p in pals)
                        + K * N * _isz(compute_dtype)
                        + N * _isz(bias.dtype)
                        + M * N * _isz(out_dtype)))

    if not use_split:
        x_spec = pl.BlockSpec((tm_eff, n_embd), lambda i: (i, 0))
        out_spec = pl.BlockSpec((tm_eff, N), lambda i: (i, 0))
        b_spec = _const_spec((1, N), lambda i: (0, 0), single_buffer_weight)
        fuse_branches = (num_branches > 1) and (n_embd < 256)
        if fuse_branches:
            w_arr = w_t
            w_spec = _const_spec((K, N), lambda i: (0, 0), single_buffer_weight)
        else:
            w_arr = w_t.reshape(num_branches, n_embd, N)   # free, contiguous
            w_spec = _const_spec((num_branches, n_embd, N), lambda i: (0, 0, 0),
                                 single_buffer_weight)
        kernel = _make_resident_kernel(num_branches, fuse_branches, compute_dtype)
        out2d = pl.pallas_call(
            kernel,
            out_shape=jax.ShapeDtypeStruct((M, N), out_dtype),
            grid=(grid_m,),
            in_specs=[x_spec] * (1 + num_branches) + [w_spec, b_spec],
            out_specs=out_spec,
            compiler_params=pltpu.CompilerParams(
                dimension_semantics=("parallel",),
                vmem_limit_bytes=vmem_limit),
            cost_estimate=cost,
        )(orig2d, *pal2ds, w_arr, b2d)
    else:
        # Branch-split accumulator path: weight VMEM bounded to one (n_embd, N)
        # slab per step (plus pipelining), independent of total K.
        x_spec = pl.BlockSpec((tm_eff, n_embd), lambda i, bj: (i, 0))
        out_spec = pl.BlockSpec((tm_eff, N), lambda i, bj: (i, 0))
        b_spec = _const_spec((1, N), lambda i, bj: (0, 0), single_buffer_weight)
        w_arr = w_t.reshape(num_branches, n_embd, N)
        w_spec = pl.BlockSpec((None, n_embd, N), lambda i, bj: (bj, 0, 0))
        kernel = _make_split_kernel(num_branches, compute_dtype)
        out2d = pl.pallas_call(
            kernel,
            out_shape=jax.ShapeDtypeStruct((M, N), out_dtype),
            grid=(grid_m, num_branches),
            in_specs=[x_spec] * (1 + num_branches) + [w_spec, b_spec],
            out_specs=out_spec,
            scratch_shapes=[pltpu.VMEM((tm_eff, N), jnp.float32)],
            compiler_params=pltpu.CompilerParams(
                dimension_semantics=("parallel", "arbitrary"),
                vmem_limit_bytes=vmem_limit),
            cost_estimate=cost,
        )(orig2d, *pal2ds, w_arr, b2d)

    return out2d.reshape(*lead, N)


_SINGLE_BUFFER_WEIGHT_OK = None  # resolved on first call


def blend_layer_linear_pals(x, w_t, b, *, tm=512, force_split=False):
    """x: list [original, pal_1, ..., pal_nb], each (..., n_embd).
    w_t: (n_embd * num_branches, n_embd) == nn.Linear weight, pre-transposed.
    b:   (n_embd,)."""
    global _SINGLE_BUFFER_WEIGHT_OK
    original, pals = x[0], tuple(x[1:])
    if _SINGLE_BUFFER_WEIGHT_OK is not False:
        try:
            out = _blend_impl(original, pals, w_t, b, tm=tm,
                              force_split=force_split, single_buffer_weight=True)
            if _SINGLE_BUFFER_WEIGHT_OK is None:
                jax.block_until_ready(out)   # surface compile errors once
                _SINGLE_BUFFER_WEIGHT_OK = True
            return out
        except Exception:
            # pl.Buffered(1) rejected by this Pallas/Mosaic version -> fall back
            # to default (double-buffered) weight/bias specs.
            _SINGLE_BUFFER_WEIGHT_OK = False
    return _blend_impl(original, pals, w_t, b, tm=tm,
                       force_split=force_split, single_buffer_weight=False)


def _reference(x, w, b):
    # Plain-JAX reference: (x0 + cat(x[1:]) @ w.T + b) / 2
    merged = jnp.concatenate(list(x[1:]), axis=-1)
    return (x[0] + merged @ w.T + b) * 0.5


if __name__ == "__main__":
    # Small config consistent with the module:
    #   n_embd = 32, branch_structure has 2 branches -> x = [original, pal1, pal2]
    batch, seq, n_embd = 2, 8, 32
    num_branches = 2
    K, N = n_embd * num_branches, n_embd

    key = jax.random.PRNGKey(0)
    k_x, k_w, k_b = jax.random.split(key, 3)

    xs = jax.random.normal(k_x, (num_branches + 1, batch, seq, n_embd),
                           dtype=jnp.float32)
    x = [xs[i] for i in range(num_branches + 1)]

    # nn.Linear(K, N): weight (N, K), bias (N,).
    w = jax.random.normal(k_w, (N, K), dtype=jnp.float32) * 0.02
    b = jax.random.normal(k_b, (N,), dtype=jnp.float32) * 0.02
    w_t = w.T  # (K, N) layout -- pre-transposed once, outside the kernel

    ref = _reference(x, w, b)

    # Resident-weight path (fused single dot since n_embd < 256), f32 MXU.
    out = jax.block_until_ready(blend_layer_linear_pals(x, w_t, b))
    assert out.shape == (batch, seq, n_embd)
    assert jnp.allclose(out, ref, atol=1e-5, rtol=1e-5)

    # Ragged token count -> single full-extent / masked-edge tiling (no jnp.pad).
    x_odd = [xi[:, :5] for xi in x]                # M = 2 * 5 = 10
    ref_odd = _reference(x_odd, w, b)
    out_odd = jax.block_until_ready(blend_layer_linear_pals(x_odd, w_t, b))
    assert out_odd.shape == (batch, 5, n_embd)
    assert jnp.allclose(out_odd, ref_odd, atol=1e-5, rtol=1e-5)

    # bf16 MXU path: only the weight is pre-converted (once, outside the
    # kernel); activations stay f32 in HBM and are cast in-kernel on the VPU.
    out_bf16 = jax.block_until_ready(
        blend_layer_linear_pals(x, w_t.astype(jnp.bfloat16), b))
    assert jnp.allclose(out_bf16, ref, atol=5e-2, rtol=5e-2)

    # Branch-split accumulator path (big-weight / v7x fallback), forced so it
    # is exercised at demo scale.
    out_split = jax.block_until_ready(
        blend_layer_linear_pals(x, w_t, b, force_split=True))
    assert jnp.allclose(out_split, ref, atol=1e-5, rtol=1e-5)

    # Wider branches (n_embd >= 256) -> per-branch slab-dot resident path.
    n_embd_w = 256
    Kw, Nw = n_embd_w * num_branches, n_embd_w
    kx2, kw2, kb2 = jax.random.split(jax.random.PRNGKey(1), 3)
    xs2 = jax.random.normal(kx2, (num_branches + 1, batch, seq, n_embd_w),
                            dtype=jnp.float32)
    x2 = [xs2[i] for i in range(num_branches + 1)]
    w2 = jax.random.normal(kw2, (Nw, Kw), dtype=jnp.float32) * 0.02
    b2 = jax.random.normal(kb2, (Nw,), dtype=jnp.float32) * 0.02
    ref2 = _reference(x2, w2, b2)
    out2 = jax.block_until_ready(blend_layer_linear_pals(x2, w2.T, b2))
    assert out2.shape == (batch, seq, n_embd_w)
    assert jnp.allclose(out2, ref2, atol=1e-4, rtol=1e-4)

    print("KERNEL_OK")
</pallas_src>

<mosaic_0001>
module attributes {stable_mosaic.version = 11 : i64} {
  func.func @kernel(%arg0: i32, %arg1: memref<16x32xf32, #tpu.memory_space<vmem>>, %arg2: memref<16x32xf32, #tpu.memory_space<vmem>>, %arg3: memref<16x32xf32, #tpu.memory_space<vmem>>, %arg4: memref<64x32xf32, #tpu.memory_space<vmem>>, %arg5: memref<1x32xf32, #tpu.memory_space<vmem>>, %arg6: memref<16x32xf32, #tpu.memory_space<vmem>>) attributes {dimension_semantics = [#tpu.dimension_semantics<parallel>], iteration_bounds = array<i64: 1>, scalar_prefetch = 0 : i64, scratch_operands = 0 : i64, tpu.core_type = #tpu.core_type<tc>, window_params = [{transform_indices = @transform_0, window_bounds = array<i64: 16, 32>}, {transform_indices = @transform_1, window_bounds = array<i64: 16, 32>}, {transform_indices = @transform_2, window_bounds = array<i64: 16, 32>}, {pipeline_mode = #tpu.pipeline_mode<synchronous>, transform_indices = @transform_3, window_bounds = array<i64: 64, 32>}, {pipeline_mode = #tpu.pipeline_mode<synchronous>, transform_indices = @transform_4, window_bounds = array<i64: 1, 32>}, {transform_indices = @transform_5, window_bounds = array<i64: 16, 32>}]} {
    %c0 = arith.constant 0 : index
    %c0_0 = arith.constant 0 : index
    %0 = vector.load %arg2[%c0, %c0_0] : memref<16x32xf32, #tpu.memory_space<vmem>>, vector<16x32xf32>
    %c0_1 = arith.constant 0 : index
    %c0_2 = arith.constant 0 : index
    %1 = vector.load %arg3[%c0_1, %c0_2] : memref<16x32xf32, #tpu.memory_space<vmem>>, vector<16x32xf32>
    %2 = tpu.concatenate %0, %1 in 1 : vector<16x32xf32>, vector<16x32xf32> -> vector<16x64xf32>
    %c0_3 = arith.constant 0 : index
    %c0_4 = arith.constant 0 : index
    %3 = vector.load %arg4[%c0_3, %c0_4] : memref<64x32xf32, #tpu.memory_space<vmem>>, vector<64x32xf32>
    %cst = arith.constant dense<0.000000e+00> : vector<16x32xf32>
    %4 = tpu.matmul %2, %3, %cst {dimension_numbers = #tpu.dot_dimension_numbers<[1], [0], [0], [1], [0, 0, 1, 1], [], []>} : vector<16x64xf32>, vector<64x32xf32>, vector<16x32xf32> -> vector<16x32xf32>
    %c0_5 = arith.constant 0 : index
    %c0_6 = arith.constant 0 : index
    %5 = vector.load %arg1[%c0_5, %c0_6] : memref<16x32xf32, #tpu.memory_space<vmem>>, vector<16x32xf32>
    %6 = arith.addf %5, %4 : vector<16x32xf32>
    %c0_7 = arith.constant 0 : index
    %c0_8 = arith.constant 0 : index
    %7 = vector.load %arg5[%c0_7, %c0_8] : memref<1x32xf32, #tpu.memory_space<vmem>>, vector<1x32xf32>
    %8 = vector.broadcast %7 : vector<1x32xf32> to vector<16x32xf32>
    %9 = arith.addf %6, %8 : vector<16x32xf32>
    %cst_9 = arith.constant 5.000000e-01 : f32
    %10 = vector.broadcast %cst_9 : f32 to vector<16x32xf32>
    %11 = arith.mulf %9, %10 : vector<16x32xf32>
    %c0_10 = arith.constant 0 : index
    %c0_11 = arith.constant 0 : index
    %12 = vector.load %arg6[%c0_10, %c0_11] : memref<16x32xf32, #tpu.memory_space<vmem>>, vector<16x32xf32>
    tpu.vector_store %arg6[%c0_10, %c0_11], %11 {strides = array<i32>} : memref<16x32xf32, #tpu.memory_space<vmem>>, vector<16x32xf32>,
    return
  }
  func.func @transform_0(%arg0: i32) -> (i32, i32) {
    %c0_i32 = arith.constant 0 : i32
    %c0_i32_0 = arith.constant 0 : i32
    return %arg0, %c0_i32 : i32, i32
  }
  func.func @transform_1(%arg0: i32) -> (i32, i32) {
    %c0_i32 = arith.constant 0 : i32
    %c0_i32_0 = arith.constant 0 : i32
    return %arg0, %c0_i32 : i32, i32
  }
  func.func @transform_2(%arg0: i32) -> (i32, i32) {
    %c0_i32 = arith.constant 0 : i32
    %c0_i32_0 = arith.constant 0 : i32
    return %arg0, %c0_i32 : i32, i32
  }
  func.func @transform_3(%arg0: i32) -> (i32, i32) {
    %c0_i32 = arith.constant 0 : i32
    %c0_i32_0 = arith.constant 0 : i32
    %c0_i32_1 = arith.constant 0 : i32
    return %c0_i32, %c0_i32_0 : i32, i32
  }
  func.func @transform_4(%arg0: i32) -> (i32, i32) {
    %c0_i32 = arith.constant 0 : i32
    %c0_i32_0 = arith.constant 0 : i32
    %c0_i32_1 = arith.constant 0 : i32
    return %c0_i32, %c0_i32_0 : i32, i32
  }
  func.func @transform_5(%arg0: i32) -> (i32, i32) {
    %c0_i32 = arith.constant 0 : i32
    %c0_i32_0 = arith.constant 0 : i32
    return %arg0, %c0_i32 : i32, i32
  }
}

module attributes {stable_mosaic.version = 11 : i64} {
  func.func @kernel(%arg0: i32, %arg1: memref<16x32xf32, #tpu.memory_space<vmem>>, %arg2: memref<16x32xf32, #tpu.memory_space<vmem>>, %arg3: memref<16x32xf32, #tpu.memory_space<vmem>>, %arg4: memref<64x32xf32, #tpu.memory_space<vmem>>, %arg5: memref<1x32xf32, #tpu.memory_space<vmem>>, %arg6: memref<16x32xf32, #tpu.memory_space<vmem>>) attributes {dimension_semantics = [#tpu.dimension_semantics<parallel>], iteration_bounds = array<i64: 1>, scalar_prefetch = 0 : i64, scratch_operands = 0 : i64, tpu.core_type = #tpu.core_type<tc>, window_params = [{transform_indices = @transform_0, window_bounds = array<i64: 16, 32>}, {transform_indices = @transform_1, window_bounds = array<i64: 16, 32>}, {transform_indices = @transform_2, window_bounds = array<i64: 16, 32>}, {pipeline_mode = #tpu.pipeline_mode<synchronous>, transform_indices = @transform_3, window_bounds = array<i64: 64, 32>}, {pipeline_mode = #tpu.pipeline_mode<synchronous>, transform_indices = @transform_4, window_bounds = array<i64: 1, 32>}, {transform_indices = @transform_5, window_bounds = array<i64: 16, 32>}]} {
    %c0 = arith.constant 0 : index
    %c0_0 = arith.constant 0 : index
    %0 = vector.load %arg2[%c0, %c0_0] : memref<16x32xf32, #tpu.memory_space<vmem>>, vector<16x32xf32>
    %c0_1 = arith.constant 0 : index
    %c0_2 = arith.constant 0 : index
    %1 = vector.load %arg3[%c0_1, %c0_2] : memref<16x32xf32, #tpu.memory_space<vmem>>, vector<16x32xf32>
    %2 = tpu.concatenate %0, %1 in 1 : vector<16x32xf32>, vector<16x32xf32> -> vector<16x64xf32>
    %c0_3 = arith.constant 0 : index
    %c0_4 = arith.constant 0 : index
    %3 = vector.load %arg4[%c0_3, %c0_4] : memref<64x32xf32, #tpu.memory_space<vmem>>, vector<64x32xf32>
    %cst = arith.constant dense<0.000000e+00> : vector<16x32xf32>
    %4 = tpu.matmul %2, %3, %cst {dimension_numbers = #tpu.dot_dimension_numbers<[1], [0], [0], [1], [0, 0, 1, 1], [], []>} : vector<16x64xf32>, vector<64x32xf32>, vector<16x32xf32> -> vector<16x32xf32>
    %c0_5 = arith.constant 0 : index
    %c0_6 = arith.constant 0 : index
    %5 = vector.load %arg1[%c0_5, %c0_6] : memref<16x32xf32, #tpu.memory_space<vmem>>, vector<16x32xf32>
    %6 = arith.addf %5, %4 : vector<16x32xf32>
    %c0_7 = arith.constant 0 : index
    %c0_8 = arith.constant 0 : index
    %7 = vector.load %arg5[%c0_7, %c0_8] : memref<1x32xf32, #tpu.memory_space<vmem>>, vector<1x32xf32>
    %8 = vector.broadcast %7 : vector<1x32xf32> to vector<16x32xf32>
    %9 = arith.addf %6, %8 : vector<16x32xf32>
    %cst_9 = arith.constant 5.000000e-01 : f32
    %10 = vector.broadcast %cst_9 : f32 to vector<16x32xf32>
    %11 = arith.mulf %9, %10 : vector<16x32xf32>
    %c0_10 = arith.constant 0 : index
    %c0_11 = arith.constant 0 : index
    %12 = vector.load %arg6[%c0_10, %c0_11] : memref<16x32xf32, #tpu.memory_space<vmem>>, vector<16x32xf32>
    tpu.vector_store %arg6[%c0_10, %c0_11], %11 {strides = array<i32>} : memref<16x32xf32, #tpu.memory_space<vmem>>, vector<16x32xf32>,
    return
  }
  func.func @transform_0(%arg0: i32) -> (i32, i32) {
    %c0_i32 = arith.constant 0 : i32
    %c0_i32_0 = arith.constant 0 : i32
    return %arg0, %c0_i32 : i32, i32
  }
  func.func @transform_1(%arg0: i32) -> (i32, i32) {
    %c0_i32 = arith.constant 0 : i32
    %c0_i32_0 = arith.constant 0 : i32
    return %arg0, %c0_i32 : i32, i32
  }
  func.func @transform_2(%arg0: i32) -> (i32, i32) {
    %c0_i32 = arith.constant 0 : i32
    %c0_i32_0 = arith.constant 0 : i32
    return %arg0, %c0_i32 : i32, i32
  }
  func.func @transform_3(%arg0: i32) -> (i32, i32) {
    %c0_i32 = arith.constant 0 : i32
    %c0_i32_0 = arith.constant 0 : i32
    %c0_i32_1 = arith.constant 0 : i32
    return %c0_i32, %c0_i32_0 : i32, i32
  }
  func.func @transform_4(%arg0: i32) -> (i32, i32) {
    %c0_i32 = arith.constant 0 : i32
    %c0_i32_0 = arith.constant 0 : i32
    %c0_i32_1 = arith.constant 0 : i32
    return %c0_i32, %c0_i32_0 : i32, i32
  }
  func.func @transform_5(%arg0: i32) -> (i32, i32) {
    %c0_i32 = arith.constant 0 : i32
    %c0_i32_0 = arith.constant 0 : i32
    return %arg0, %c0_i32 : i32, i32
  }
}

</mosaic_0001>

<llo_original>
// kernel: _blend_impl.1
$region0: #{_blend_impl.1}
  #allocation0 [shape = 'u32[]', space=smem, size = 0x4, offset = 0x4, fixed_abs, tag = 'smem constant byte address 0x4 - core index']
  #allocation1 [shape = 'u32[144,128]{1,0:T(1,128)}', space=vmem, size = 0x12000, scoped, tag = 'internal scratch']
  %s0 = inlined_call_operand.vmem [shape: f32[16,32], index: 0, kind: input, shape index: {}]
  %s1 = inlined_call_operand.vmem [shape: f32[16,32], index: 1, kind: input, shape index: {}]
  %s2 = inlined_call_operand.vmem [shape: f32[16,32], index: 2, kind: input, shape index: {}]
  %s3 = inlined_call_operand.vmem [shape: f32[64,32], index: 3, kind: input, shape index: {}]
  %s4 = inlined_call_operand.vmem [shape: f32[1,32], index: 4, kind: input, shape index: {}]
  %s5 = inlined_call_operand.hbm [shape: f32[16,32], index: 5, kind: output, shape index: {}]
  %s6 = sld [smem:[#allocation0]]
  $region30: #{_blend_impl.1} parent=0
    _
  %s8 = ssub.s32 1, %s6
  %s9 = scalar_select 0, %s8, %s6
  $region1: #{_blend_impl.1} parent=0
    #allocation2 [shape = 'u8[8192]{0}', space=vmem, size = 0x2000, scoped, tag = 'output window, operand 0, single buffered']
    #allocation3 [shape = 's32[1]{0}', space=sflag, size = 0x4, scoped, tag = 'scoped memory for _blend_impl.1']
    %10 = vsyncpa [#allocation3], 0
    // Predicated region
    $region2: #{_blend_impl.1} parent=1 // pred_check
      _
    $region3: #{_blend_impl.1} parent=1 // pred_check_branch
      %12 = sbr.rel (0) target = $region5
    $region4: #{_blend_impl.1} parent=1 // pred_region
      _
    $region5: #{_blend_impl.1} parent=1 // pred_fallthru
      _
    // Predicated region
    $region6: #{_blend_impl.1} parent=1 // pred_check
      _
    $region7: #{_blend_impl.1} parent=1 // pred_check_branch
      %14 = sbr.rel (0) target = $region9
    $region8: #{_blend_impl.1} parent=1 // pred_region
      _
    $region9: #{_blend_impl.1} parent=1 // pred_fallthru
      _
    // Predicated region
    $region10: #{_blend_impl.1} parent=1 // pred_check
      _
    $region11: #{_blend_impl.1} parent=1 // pred_check_branch
      %16 = sbr.rel (0) target = $region13
    $region12: #{_blend_impl.1} parent=1 // pred_region
      _
    $region13: #{_blend_impl.1} parent=1 // pred_fallthru
      _
    // Predicated region
    $region14: #{_blend_impl.1} parent=1 // pred_check
      _
    $region15: #{_blend_impl.1} parent=1 // pred_check_branch
      %18 = sbr.rel (0) target = $region17
    $region16: #{_blend_impl.1} parent=1 // pred_region
      _
    $region17: #{_blend_impl.1} parent=1 // pred_fallthru
      _
    // Predicated region
    $region18: #{_blend_impl.1} parent=1 // pred_check
      _
    $region19: #{_blend_impl.1} parent=1 // pred_check_branch
      %20 = sbr.rel (0) target = $region21
    $region20: #{_blend_impl.1} parent=1 // pred_region
      _
    $region21: #{_blend_impl.1} parent=1 // pred_fallthru
      _
    %v21 = vld [vmem:[%s1] sm:$0xff]
    %v22 = vld [vmem:[%s1 + $0x8] sm:$0xff]
    %v23 = vld [vmem:[%s2] sm:$0xff]
    %v24 = vld [vmem:[%s2 + $0x8] sm:$0xff]
    %27 = vrot.lane.b32.xlu0 %v23, 32
    %v28 = vpop.permute.xlu0 %27
    %29 = vrot.lane.b32.xlu0 %v24, 32
    %v30 = vpop.permute.xlu0 %29
    %vm33 = vcmask 261120
    %v34 = vsel %vm33, %v21, %v28
    %v35 = vsel %vm33, %v22, %v30
    %v36 = vld [vmem:[%s3] sm:$0xff]
    %v37 = vld [vmem:[%s3 + $0x8] sm:$0xff]
    %v38 = vld [vmem:[%s3 + $0x10] sm:$0xff]
    %v39 = vld [vmem:[%s3 + $0x18] sm:$0xff]
    %v40 = vld [vmem:[%s3 + $0x20] sm:$0xff]
    %v41 = vld [vmem:[%s3 + $0x28] sm:$0xff]
    %v42 = vld [vmem:[%s3 + $0x30] sm:$0xff]
    %v43 = vld [vmem:[%s3 + $0x38] sm:$0xff]
    %vm44 = vcmask 523264
    %v46 = vsel %vm44, %v34, 0
    %v49 = vsel %vm44, %v35, 0
    %51 = vmatprep.subr.mxu0 0.0
    %52 = vmatpush1.msra.mxu0 %v36
    %53 = vmatprep.subr.mxu0 0.0
    %54 = vmatpush1.msra.mxu0 %v37
    %55 = vmatprep.subr.mxu0 0.0
    %56 = vmatpush1.msra.mxu0 %v38
    %57 = vmatprep.subr.mxu0 0.0
    %58 = vmatpush1.msra.mxu0 %v39
    %59 = vmatprep.subr.mxu0 0.0
    %60 = vmatpush1.msra.mxu0 %v40
    %61 = vmatprep.subr.mxu0 0.0
    %62 = vmatpush1.msra.mxu0 %v41
    %63 = vmatprep.subr.mxu0 0.0
    %64 = vmatpush1.msra.mxu0 %v42
    %65 = vmatprep.subr.mxu0 0.0
    %66 = vmatpush1.msra.mxu0 %v43
    %67 = vmatprep.subr.mxu0 0.0
    %68 = vmatpush1.msra.mxu0 0.0
    %69 = vmatprep.subr.mxu0 0.0
    %70 = vmatpush1.msra.mxu0 0.0
    %71 = vmatprep.subr.mxu0 0.0
    %72 = vmatpush1.msra.mxu0 0.0
    %73 = vmatprep.subr.mxu0 0.0
    %74 = vmatpush1.msra.mxu0 0.0
    %75 = vmatprep.subr.mxu0 0.0
    %76 = vmatpush1.msra.mxu0 0.0
    %77 = vmatprep.subr.mxu0 0.0
    %78 = vmatpush1.msra.mxu0 0.0
    %79 = vmatprep.subr.mxu0 0.0
    %80 = vmatpush1.msra.mxu0 0.0
    %81 = vmatprep.subr.mxu0 0.0
    %82 = vmatpush1.msra.mxu0 0.0
    %83 = vmatprep.subr.mxu0 0.0
    %84 = vmatpush1.msra.mxu0 0.0
    %85 = vmatprep.subr.mxu0 0.0
    %86 = vmatpush1.msra.mxu0 0.0
    %87 = vmatprep.subr.mxu0 0.0
    %88 = vmatpush1.msra.mxu0 0.0
    %89 = vmatprep.subr.mxu0 0.0
    %90 = vmatpush1.msra.mxu0 0.0
    %91 = vmatprep.subr.mxu0 0.0
    %92 = vmatpush1.msra.mxu0 0.0
    %93 = vmatprep.subr.mxu0 0.0
    %94 = vmatpush1.msra.mxu0 0.0
    %95 = vmatprep.subr.mxu0 0.0
    %96 = vmatpush1.msra.mxu0 0.0
    %97 = vmatprep.subr.mxu0 0.0
    %98 = vmatpush1.msra.mxu0 0.0
    %99 = vmatprep.subr.mxu0 0.0
    %100 = vmatpush1.msra.mxu0 0.0
    %101 = vmatprep.subr.mxu0 0.0
    %102 = vmatpush1.msra.mxu0 0.0
    %103 = vmatprep.subr.mxu0 0.0
    %104 = vmatpush1.msra.mxu0 0.0
    %105 = vmatprep.subr.mxu0 0.0
    %106 = vmatpush1.msra.mxu0 0.0
    %107 = vmatprep.subr.mxu0 0.0
    %108 = vmatpush1.msra.mxu0 0.0
    %109 = vmatprep.subr.mxu0 0.0
    %110 = vmatpush1.msra.mxu0 0.0
    %111 = vmatprep.subr.mxu0 0.0
    %112 = vmatpush1.msra.mxu0 0.0
    %113 = vmatprep.subr.mxu0 0.0
    %114 = vmatpush1.msra.mxu0 0.0
    %115 = vmatprep.mubr.f32.mxu0 0.0
    %116 = vmatmul.mubr.f32.gmra.mrb[0].mxu0 %v46
    %v117 = vpop.f32.mrb[0].mxu0
    %v118 = vadd.f32 0.0, %v117
    %v119 = vpop.f32.mrb[0].mxu0
    %120 = vmatprep.mubr.f32.mxu0 0.0
    %121 = vmatmul.mubr.f32.gmra.mrb[0].mxu0 %v49
    %v122 = vpop.f32.mrb[0].mxu0
    %v123 = vadd.f32 0.0, %v122
    %v124 = vpop.f32.mrb[0].mxu0
    %125 = vdwg.mxu0
    %v126 = vld [vmem:[%s0] sm:$0xff]
    %v127 = vld [vmem:[%s0 + $0x8] sm:$0xff]
    %v128 = vadd.f32 %v126, %v118
    %v129 = vadd.f32 %v127, %v123
    %v130 = vld [vmem:[%s4] sm:$0x1]
    %v132 = vlaneseq
    %v133 = vshrl.u32 %v132, 7
    %v134 = vsub.s32 0, %v133
    %v135 = vrot.slane %v130, %v134
    %v137 = vadd.f32 %v128, %v135
    %v138 = vadd.f32 %v129, %v135
    %v139 = vmul.f32 %v137, 0.5
    %v140 = vmul.f32 %v138, 0.5
    %141 = vst.msk [vmem:[#allocation2] sm:$0xff] %vm33, %v139
    %142 = vst.msk [vmem:[#allocation2 + $0x8] sm:$0xff] %vm33, %v140
    // Predicated region
    $region22: #{_blend_impl.1} parent=1 // pred_check
      _
    $region23: #{_blend_impl.1} parent=1 // pred_check_branch
      %144 = sbr.rel (0) target = $region25
    $region24: #{_blend_impl.1} parent=1 // pred_region
      %s146 = ssub.s32 256, 256
      %147 = vsyncadd [#allocation3], %s146
      %s148 = sshll.u32 [#allocation2], 4
      %s149 = int_to_ptr.vmem [resolvable:$true] %s148
      %154 = dma.vmem_to_hbm [thread:$0]  %s149, 256, %s5, [#allocation3], 128, 128, 8
    $region25: #{_blend_impl.1} parent=1 // pred_fallthru
      _
    // Predicated region
    $region26: #{_blend_impl.1} parent=1 // pred_check
      _
    $region27: #{_blend_impl.1} parent=1 // pred_check_branch
      %156 = sbr.rel (0) target = $region29
    $region28: #{_blend_impl.1} parent=1 // pred_region
      %157 = dma.done [#allocation3], 256
    $region29: #{_blend_impl.1} parent=1 // pred_fallthru
      _
    %158 = vsyncpa [#allocation3], 1

// kernel: _blend_impl.1
$region0: #{_blend_impl.1}
  #allocation0 [shape = 'u32[]', space=smem, size = 0x4, offset = 0x4, fixed_abs, tag = 'smem constant byte address 0x4 - core index']
  #allocation1 [shape = 'u32[144,128]{1,0:T(1,128)}', space=vmem, size = 0x12000, scoped, tag = 'internal scratch']
  %s0 = inlined_call_operand.vmem [shape: f32[16,32], index: 0, kind: input, shape index: {}]
  %s1 = inlined_call_operand.vmem [shape: f32[16,32], index: 1, kind: input, shape index: {}]
  %s2 = inlined_call_operand.vmem [shape: f32[16,32], index: 2, kind: input, shape index: {}]
  %s3 = inlined_call_operand.vmem [shape: f32[64,32], index: 3, kind: input, shape index: {}]
  %s4 = inlined_call_operand.vmem [shape: f32[1,32], index: 4, kind: input, shape index: {}]
  %s5 = inlined_call_operand.hbm [shape: f32[16,32], index: 5, kind: output, shape index: {}]
  %s6 = sld [smem:[#allocation0]]
  $region30: #{_blend_impl.1} parent=0
    _
  %s8 = ssub.s32 1, %s6
  %s9 = scalar_select 0, %s8, %s6
  $region1: #{_blend_impl.1} parent=0
    #allocation2 [shape = 'u8[8192]{0}', space=vmem, size = 0x2000, scoped, tag = 'output window, operand 0, single buffered']
    #allocation3 [shape = 's32[1]{0}', space=sflag, size = 0x4, scoped, tag = 'scoped memory for _blend_impl.1']
    %10 = vsyncpa [#allocation3], 0
    // Predicated region
    $region2: #{_blend_impl.1} parent=1 // pred_check
      _
    $region3: #{_blend_impl.1} parent=1 // pred_check_branch
      %12 = sbr.rel (0) target = $region5
    $region4: #{_blend_impl.1} parent=1 // pred_region
      _
    $region5: #{_blend_impl.1} parent=1 // pred_fallthru
      _
    // Predicated region
    $region6: #{_blend_impl.1} parent=1 // pred_check
      _
    $region7: #{_blend_impl.1} parent=1 // pred_check_branch
      %14 = sbr.rel (0) target = $region9
    $region8: #{_blend_impl.1} parent=1 // pred_region
      _
    $region9: #{_blend_impl.1} parent=1 // pred_fallthru
      _
    // Predicated region
    $region10: #{_blend_impl.1} parent=1 // pred_check
      _
    $region11: #{_blend_impl.1} parent=1 // pred_check_branch
      %16 = sbr.rel (0) target = $region13
    $region12: #{_blend_impl.1} parent=1 // pred_region
      _
    $region13: #{_blend_impl.1} parent=1 // pred_fallthru
      _
    // Predicated region
    $region14: #{_blend_impl.1} parent=1 // pred_check
      _
    $region15: #{_blend_impl.1} parent=1 // pred_check_branch
      %18 = sbr.rel (0) target = $region17
    $region16: #{_blend_impl.1} parent=1 // pred_region
      _
    $region17: #{_blend_impl.1} parent=1 // pred_fallthru
      _
    // Predicated region
    $region18: #{_blend_impl.1} parent=1 // pred_check
      _
    $region19: #{_blend_impl.1} parent=1 // pred_check_branch
      %20 = sbr.rel (0) target = $region21
    $region20: #{_blend_impl.1} parent=1 // pred_region
      _
    $region21: #{_blend_impl.1} parent=1 // pred_fallthru
      _
    %v21 = vld [vmem:[%s1] sm:$0xff]
    %v22 = vld [vmem:[%s1 + $0x8] sm:$0xff]
    %v23 = vld [vmem:[%s2] sm:$0xff]
    %v24 = vld [vmem:[%s2 + $0x8] sm:$0xff]
    %27 = vrot.lane.b32.xlu0 %v23, 32
    %v28 = vpop.permute.xlu0 %27
    %29 = vrot.lane.b32.xlu0 %v24, 32
    %v30 = vpop.permute.xlu0 %29
    %vm33 = vcmask 261120
    %v34 = vsel %vm33, %v21, %v28
    %v35 = vsel %vm33, %v22, %v30
    %v36 = vld [vmem:[%s3] sm:$0xff]
    %v37 = vld [vmem:[%s3 + $0x8] sm:$0xff]
    %v38 = vld [vmem:[%s3 + $0x10] sm:$0xff]
    %v39 = vld [vmem:[%s3 + $0x18] sm:$0xff]
    %v40 = vld [vmem:[%s3 + $0x20] sm:$0xff]
    %v41 = vld [vmem:[%s3 + $0x28] sm:$0xff]
    %v42 = vld [vmem:[%s3 + $0x30] sm:$0xff]
    %v43 = vld [vmem:[%s3 + $0x38] sm:$0xff]
    %vm44 = vcmask 523264
    %v46 = vsel %vm44, %v34, 0
    %v49 = vsel %vm44, %v35, 0
    %51 = vmatprep.subr.mxu0 0.0
    %52 = vmatpush1.msra.mxu0 %v36
    %53 = vmatprep.subr.mxu0 0.0
    %54 = vmatpush1.msra.mxu0 %v37
    %55 = vmatprep.subr.mxu0 0.0
    %56 = vmatpush1.msra.mxu0 %v38
    %57 = vmatprep.subr.mxu0 0.0
    %58 = vmatpush1.msra.mxu0 %v39
    %59 = vmatprep.subr.mxu0 0.0
    %60 = vmatpush1.msra.mxu0 %v40
    %61 = vmatprep.subr.mxu0 0.0
    %62 = vmatpush1.msra.mxu0 %v41
    %63 = vmatprep.subr.mxu0 0.0
    %64 = vmatpush1.msra.mxu0 %v42
    %65 = vmatprep.subr.mxu0 0.0
    %66 = vmatpush1.msra.mxu0 %v43
    %67 = vmatprep.subr.mxu0 0.0
    %68 = vmatpush1.msra.mxu0 0.0
    %69 = vmatprep.subr.mxu0 0.0
    %70 = vmatpush1.msra.mxu0 0.0
    %71 = vmatprep.subr.mxu0 0.0
    %72 = vmatpush1.msra.mxu0 0.0
    %73 = vmatprep.subr.mxu0 0.0
    %74 = vmatpush1.msra.mxu0 0.0
    %75 = vmatprep.subr.mxu0 0.0
    %76 = vmatpush1.msra.mxu0 0.0
    %77 = vmatprep.subr.mxu0 0.0
    %78 = vmatpush1.msra.mxu0 0.0
    %79 = vmatprep.subr.mxu0 0.0
    %80 = vmatpush1.msra.mxu0 0.0
    %81 = vmatprep.subr.mxu0 0.0
    %82 = vmatpush1.msra.mxu0 0.0
    %83 = vmatprep.subr.mxu0 0.0
    %84 = vmatpush1.msra.mxu0 0.0
    %85 = vmatprep.subr.mxu0 0.0
    %86 = vmatpush1.msra.mxu0 0.0
    %87 = vmatprep.subr.mxu0 0.0
    %88 = vmatpush1.msra.mxu0 0.0
    %89 = vmatprep.subr.mxu0 0.0
    %90 = vmatpush1.msra.mxu0 0.0
    %91 = vmatprep.subr.mxu0 0.0
    %92 = vmatpush1.msra.mxu0 0.0
    %93 = vmatprep.subr.mxu0 0.0
    %94 = vmatpush1.msra.mxu0 0.0
    %95 = vmatprep.subr.mxu0 0.0
    %96 = vmatpush1.msra.mxu0 0.0
    %97 = vmatprep.subr.mxu0 0.0
    %98 = vmatpush1.msra.mxu0 0.0
    %99 = vmatprep.subr.mxu0 0.0
    %100 = vmatpush1.msra.mxu0 0.0
    %101 = vmatprep.subr.mxu0 0.0
    %102 = vmatpush1.msra.mxu0 0.0
    %103 = vmatprep.subr.mxu0 0.0
    %104 = vmatpush1.msra.mxu0 0.0
    %105 = vmatprep.subr.mxu0 0.0
    %106 = vmatpush1.msra.mxu0 0.0
    %107 = vmatprep.subr.mxu0 0.0
    %108 = vmatpush1.msra.mxu0 0.0
    %109 = vmatprep.subr.mxu0 0.0
    %110 = vmatpush1.msra.mxu0 0.0
    %111 = vmatprep.subr.mxu0 0.0
    %112 = vmatpush1.msra.mxu0 0.0
    %113 = vmatprep.subr.mxu0 0.0
    %114 = vmatpush1.msra.mxu0 0.0
    %115 = vmatprep.mubr.f32.mxu0 0.0
    %116 = vmatmul.mubr.f32.gmra.mrb[0].mxu0 %v46
    %v117 = vpop.f32.mrb[0].mxu0
    %v118 = vadd.f32 0.0, %v117
    %v119 = vpop.f32.mrb[0].mxu0
    %120 = vmatprep.mubr.f32.mxu0 0.0
    %121 = vmatmul.mubr.f32.gmra.mrb[0].mxu0 %v49
    %v122 = vpop.f32.mrb[0].mxu0
    %v123 = vadd.f32 0.0, %v122
    %v124 = vpop.f32.mrb[0].mxu0
    %125 = vdwg.mxu0
    %v126 = vld [vmem:[%s0] sm:$0xff]
    %v127 = vld [vmem:[%s0 + $0x8] sm:$0xff]
    %v128 = vadd.f32 %v126, %v118
    %v129 = vadd.f32 %v127, %v123
    %v130 = vld [vmem:[%s4] sm:$0x1]
    %v132 = vlaneseq
    %v133 = vshrl.u32 %v132, 7
    %v134 = vsub.s32 0, %v133
    %v135 = vrot.slane %v130, %v134
    %v137 = vadd.f32 %v128, %v135
    %v138 = vadd.f32 %v129, %v135
    %v139 = vmul.f32 %v137, 0.5
    %v140 = vmul.f32 %v138, 0.5
    %141 = vst.msk [vmem:[#allocation2] sm:$0xff] %vm33, %v139
    %142 = vst.msk [vmem:[#allocation2 + $0x8] sm:$0xff] %vm33, %v140
    // Predicated region
    $region22: #{_blend_impl.1} parent=1 // pred_check
      _
    $region23: #{_blend_impl.1} parent=1 // pred_check_branch
      %144 = sbr.rel (0) target = $region25
    $region24: #{_blend_impl.1} parent=1 // pred_region
      %s146 = ssub.s32 256, 256
      %147 = vsyncadd [#allocation3], %s146
      %s148 = sshll.u32 [#allocation2], 4
      %s149 = int_to_ptr.vmem [resolvable:$true] %s148
      %154 = dma.vmem_to_hbm [thread:$0]  %s149, 256, %s5, [#allocation3], 128, 128, 8
    $region25: #{_blend_impl.1} parent=1 // pred_fallthru
      _
    // Predicated region
    $region26: #{_blend_impl.1} parent=1 // pred_check
      _
    $region27: #{_blend_impl.1} parent=1 // pred_check_branch
      %156 = sbr.rel (0) target = $region29
    $region28: #{_blend_impl.1} parent=1 // pred_region
      %157 = dma.done [#allocation3], 256
    $region29: #{_blend_impl.1} parent=1 // pred_fallthru
      _
    %158 = vsyncpa [#allocation3], 1

</llo_original>
